<compile_context>
chip_gen: v6e
topology: v6e:2x2x1
jax: 0.10.0
libtpu: 0.0.40
codegen_flags: <defaults>
</compile_context>

<pallas_src>
import jax
import jax.numpy as jnp
import numpy as np
from jax.experimental import pallas as pl
from jax.experimental.pallas import tpu as pltpu

_LANES = 128
_MAX_TILE_ROWS = 64          # 64 rows x 128 lanes = 8192 samples per grid step

# ---------------------------------------------------------------------------
# math helpers (all lower to plain VPU/EUP ops)
# ---------------------------------------------------------------------------
_LANCZOS_G = 7.0
_LANCZOS_C = (
    0.99999999999980993,
    676.5203681218851,
    -1259.1392167224028,
    771.32342877765313,
    -176.61502916214059,
    12.507343278686905,
    -0.13857109526572012,
    9.9843695780195716e-6,
    1.5056327351493116e-7,
)
_HALF_LOG_2PI = float(0.5 * np.log(2.0 * np.pi))


def _lanczos_numerator_coeffs():
    """Expand S(zm1) = c0 + sum_i c_i/(zm1+i) as Num(zm1) / prod_i(zm1+i)."""
    den = np.poly1d([1.0])
    for i in range(1, len(_LANCZOS_C)):
        den = den * np.poly1d([1.0, float(i)])
    num = _LANCZOS_C[0] * den
    for i in range(1, len(_LANCZOS_C)):
        term = np.poly1d([1.0])
        for j in range(1, len(_LANCZOS_C)):
            if j != i:
                term = term * np.poly1d([1.0, float(j)])
        num = num + _LANCZOS_C[i] * term
    return tuple(float(c) for c in num.coeffs)      # degree 8, highest first


_LANCZOS_NUM = _lanczos_numerator_coeffs()


def _softplus(x):
    # numerically stable softplus: max(x,0) + log(1 + exp(-|x|))
    return jnp.maximum(x, 0.0) + jnp.log(1.0 + jnp.exp(-jnp.abs(x)))


def _recip(x):
    # 1/x via EUP approx reciprocal + one Newton step (~f32 accurate).
    r = pl.reciprocal(x, approx=True)
    return r * (2.0 - x * r)


def _horner(coeffs, x):
    acc = coeffs[0] * x + coeffs[1]
    for c in coeffs[2:]:
        acc = acc * x + c
    return acc


def _lgamma(z):
    """log Gamma(z) for z > 0, Lanczos (g=7, n=9) in rational form.

    One reciprocal + 2 logs per call instead of 8 divisions + 2 logs.
    """
    zm1 = z - 1.0
    num = _horner(_LANCZOS_NUM, zm1)          # pure VPU fma chain
    den = zm1 + 1.0                           # factored product: no cancellation
    for i in range(2, len(_LANCZOS_C)):
        den = den * (zm1 + float(i))
    s = num * _recip(den)
    t = zm1 + (_LANCZOS_G + 0.5)
    return _HALF_LOG_2PI + (zm1 + 0.5) * jnp.log(t) - t + jnp.log(s)


# ---------------------------------------------------------------------------
# Pallas kernel: one grid step = up to (tile_rows * 128) samples,
# writes an (8, 128) partial sum of the weighted log-likelihood.
# ---------------------------------------------------------------------------
def _bnbsl_partial_kernel(x_ref, o_ref):
    # x_ref: (8, TR, 128), channel-major:
    #   [0:2] raw alpha params, [2:4] raw mu params, [4] omega,
    #   [5:7] value, [7] weight (0 for padded samples).
    p_alpha = x_ref[0:2]          # (2, TR, L)
    p_mu = x_ref[2:4]             # (2, TR, L)
    omega = x_ref[4]              # (TR, L)
    value = x_ref[5:7]            # (2, TR, L)
    w = x_ref[7]                  # (TR, L)

    alpha = _softplus(p_alpha)
    mu = _softplus(p_mu)

    am = alpha * mu                       # = exp(logits); mean == mu exactly
    logits = jnp.log(am)
    l1_am = jnp.log(1.0 + am)             # = -log_sigmoid(-logits)
    l1_a = jnp.log(1.0 + alpha)
    total_count = _recip(alpha)
    tc_plus_v = total_count + value

    # log-unnormalized prob: sum_c [tc*logsig(-logits) + v*logsig(logits)]
    #                      = sum_c [v*logits - (tc+v)*log(1+am)]
    log_unnorm = jnp.sum(value * logits - tc_plus_v * l1_am, axis=0)   # (TR, L)

    # Sarmanov-Lee copula term.
    # base = (1+am)/(1+alpha+am)  ->  log(base) = log(1+am) - log(1+alpha+am)
    log_base = l1_am - jnp.log(1.0 + alpha + am)
    q = jnp.exp(tc_plus_v * log_base) - jnp.exp(-total_count * l1_a)   # (2, TR, L)
    log_copula = jnp.log(jnp.maximum(1.0 + omega * (q[0] * q[1]), 1e-8))

    # log-normalization: sum_c [-lgamma(tc+v) + lgamma(1+v) + lgamma(tc)]
    log_norm = jnp.sum(_lgamma(1.0 + value) + _lgamma(total_count)
                       - _lgamma(tc_plus_v), axis=0)                   # (TR, L)

    lik = (log_unnorm - log_norm + log_copula) * w                     # (TR, L)

    tr, lanes = lik.shape
    # fold rows onto 8 sublanes (pure VPU adds), keep lanes dense
    partial = jnp.sum(lik.reshape(tr // 8, 8, lanes), axis=0)          # (8, L)
    o_ref[...] = partial.reshape(1, 8, lanes)


# ---------------------------------------------------------------------------
# wrapper
# ---------------------------------------------------------------------------
def _round_up(x, m):
    return ((x + m - 1) // m) * m


def bnbsl_nll_loss(parameters, target, *, max_tile_rows=_MAX_TILE_ROWS):
    """parameters: (N, 5) float, target: (N, 2) or (N, 3) -> scalar loss."""
    assert max_tile_rows % 8 == 0 and max_tile_rows > 0
    parameters = jnp.asarray(parameters, jnp.float32)
    target = jnp.asarray(target, jnp.float32)
    n = parameters.shape[0]

    if target.shape[-1] == 3:
        value, weight = target[:, :2], target[:, 2:3]
    else:
        value, weight = target, jnp.ones((n, 1), jnp.float32)

    # single 8-channel slab: [alpha0, alpha1, mu0, mu1, omega, v0, v1, w]
    x = jnp.concatenate([parameters[:, :5], value, weight], axis=1)    # (N, 8)

    rows = -(-n // _LANES)
    tile_rows = min(max_tile_rows, _round_up(rows, 8))
    rows_pad = _round_up(rows, tile_rows)
    n_pad = rows_pad * _LANES
    if n_pad != n:
        # padded samples get weight 0 -> contribute exactly 0
        x = jnp.pad(x, ((0, n_pad - n), (0, 0)))

    # channel-major, lane/sublane-dense layout: (8, rows_pad, 128)
    x = x.reshape(rows_pad, _LANES, 8).transpose(2, 0, 1)

    steps = rows_pad // tile_rows
    partials = pl.pallas_call(
        _bnbsl_partial_kernel,
        out_shape=jax.ShapeDtypeStruct((steps, 8, _LANES), jnp.float32),
        grid_spec=pltpu.PrefetchScalarGridSpec(
            num_scalar_prefetch=0,
            grid=(steps,),
            in_specs=[pl.BlockSpec((8, tile_rows, _LANES), lambda i: (0, i, 0))],
            out_specs=pl.BlockSpec((1, 8, _LANES), lambda i: (i, 0, 0)),
        ),
        compiler_params=pltpu.CompilerParams(
            dimension_semantics=("parallel",)),
    )(x)

    # tiny final reduction + mean in the wrapper (lets megacore split the grid)
    return -jnp.sum(partials) / n


# ---------------------------------------------------------------------------
# pure-JAX reference (mirrors the PyTorch module)
# ---------------------------------------------------------------------------
def bnbsl_nll_loss_ref(parameters, target):
    parameters = jnp.asarray(parameters, jnp.float32)
    target = jnp.asarray(target, jnp.float32)
    if target.shape[-1] == 3:
        value, weight = target[:, :2], target[:, 2]
    else:
        value, weight = target, None
    alpha = jax.nn.softplus(parameters[:, 0:2])
    mu = jax.nn.softplus(parameters[:, 2:4])
    omega = parameters[:, 4]
    total_count = 1.0 / alpha
    logits = jnp.log(alpha * mu)
    mean = total_count * jnp.exp(logits)
    Q = ((1.0 + alpha * mean) / (1.0 + alpha + alpha * mean)) ** (value + total_count) \
        - 1.0 / (1.0 + alpha) ** total_count
    log_copula = jnp.log(jnp.maximum(1.0 + omega * jnp.prod(Q, -1), 1e-8))
    log_unnorm = jnp.sum(total_count * jax.nn.log_sigmoid(-logits)
                         + value * jax.nn.log_sigmoid(logits), -1)
    log_norm = jnp.sum(-jax.scipy.special.gammaln(total_count + value)
                       + jax.scipy.special.gammaln(1.0 + value)
                       + jax.scipy.special.gammaln(total_count), -1)
    lik = log_unnorm - log_norm + log_copula
    if weight is not None:
        lik = lik * weight
    return -jnp.mean(lik)


if __name__ == "__main__":
    key = jax.random.PRNGKey(0)
    k1, k2, k3 = jax.random.split(key, 3)

    # main check: weighted target (N, 3)
    N = 300
    parameters = jax.random.normal(k1, (N, 5), jnp.float32)
    value = jnp.floor(jax.random.uniform(k2, (N, 2), minval=0.0, maxval=10.0))
    weight = jax.random.uniform(k3, (N, 1), minval=0.5, maxval=1.5)
    target = jnp.concatenate([value, weight], axis=-1)   # (N, 3)

    loss = bnbsl_nll_loss(parameters, target)
    jax.block_until_ready(loss)
    ref = bnbsl_nll_loss_ref(parameters, target)
    assert np.isfinite(float(loss))
    np.testing.assert_allclose(float(loss), float(ref), rtol=2e-3, atol=2e-3)

    # second check: no-weight target (N, 2), small tile -> multi-step grid
    k4, k5 = jax.random.split(k3)
    N2 = 2500
    parameters2 = jax.random.normal(k4, (N2, 5), jnp.float32)
    value2 = jnp.floor(jax.random.uniform(k5, (N2, 2), minval=0.0, maxval=8.0))
    loss2 = bnbsl_nll_loss(parameters2, value2, max_tile_rows=8)
    jax.block_until_ready(loss2)
    ref2 = bnbsl_nll_loss_ref(parameters2, value2)
    assert np.isfinite(float(loss2))
    np.testing.assert_allclose(float(loss2), float(ref2), rtol=2e-3, atol=2e-3)

    print("KERNEL_OK")
</pallas_src>

<mosaic_0001>
module attributes {stable_mosaic.version = 11 : i64} {
  func.func @_bnbsl_partial_kernel(%arg0: i32, %arg1: memref<8x8x128xf32, #tpu.memory_space<vmem>>, %arg2: memref<1x8x128xf32, #tpu.memory_space<vmem>>) attributes {dimension_semantics = [#tpu.dimension_semantics<parallel>], iteration_bounds = array<i64: 1>, scalar_prefetch = 0 : i64, scratch_operands = 0 : i64, tpu.core_type = #tpu.core_type<tc>, window_params = [{transform_indices = @transform_0, window_bounds = array<i64: 8, 8, 128>}, {transform_indices = @transform_1, window_bounds = array<i64: 1, 8, 128>}]} {
    %c0 = arith.constant 0 : index
    %c0_0 = arith.constant 0 : index
    %c0_1 = arith.constant 0 : index
    %0 = vector.load %arg1[%c0, %c0_0, %c0_1] : memref<8x8x128xf32, #tpu.memory_space<vmem>>, vector<2x8x128xf32>
    %c2 = arith.constant 2 : index
    %c0_2 = arith.constant 0 : index
    %c0_3 = arith.constant 0 : index
    %1 = vector.load %arg1[%c2, %c0_2, %c0_3] : memref<8x8x128xf32, #tpu.memory_space<vmem>>, vector<2x8x128xf32>
    %c4 = arith.constant 4 : index
    %c0_4 = arith.constant 0 : index
    %c0_5 = arith.constant 0 : index
    %2 = vector.load %arg1[%c4, %c0_4, %c0_5] : memref<8x8x128xf32, #tpu.memory_space<vmem>>, vector<1x8x128xf32>
    %3 = vector.shape_cast %2 : vector<1x8x128xf32> to vector<8x128xf32>
    %c5 = arith.constant 5 : index
    %c0_6 = arith.constant 0 : index
    %c0_7 = arith.constant 0 : index
    %4 = vector.load %arg1[%c5, %c0_6, %c0_7] : memref<8x8x128xf32, #tpu.memory_space<vmem>>, vector<2x8x128xf32>
    %c7 = arith.constant 7 : index
    %c0_8 = arith.constant 0 : index
    %c0_9 = arith.constant 0 : index
    %5 = vector.load %arg1[%c7, %c0_8, %c0_9] : memref<8x8x128xf32, #tpu.memory_space<vmem>>, vector<1x8x128xf32>
    %6 = vector.shape_cast %5 : vector<1x8x128xf32> to vector<8x128xf32>
    %cst = arith.constant 0.000000e+00 : f32
    %7 = vector.broadcast %cst : f32 to vector<2x8x128xf32>
    %8 = arith.maximumf %0, %7 : vector<2x8x128xf32>
    %9 = math.absf %0 : vector<2x8x128xf32>
    %cst_10 = arith.constant 0.000000e+00 : f32
    %10 = vector.broadcast %cst_10 : f32 to vector<2x8x128xf32>
    %11 = arith.subf %10, %9 : vector<2x8x128xf32>
    %12 = math.exp %11 : vector<2x8x128xf32>
    %cst_11 = arith.constant 1.000000e+00 : f32
    %13 = vector.broadcast %cst_11 : f32 to vector<2x8x128xf32>
    %14 = arith.addf %13, %12 : vector<2x8x128xf32>
    %15 = math.log %14 : vector<2x8x128xf32>
    %16 = arith.addf %8, %15 : vector<2x8x128xf32>
    %cst_12 = arith.constant 0.000000e+00 : f32
    %17 = vector.broadcast %cst_12 : f32 to vector<2x8x128xf32>
    %18 = arith.maximumf %1, %17 : vector<2x8x128xf32>
    %19 = math.absf %1 : vector<2x8x128xf32>
    %cst_13 = arith.constant 0.000000e+00 : f32
    %20 = vector.broadcast %cst_13 : f32 to vector<2x8x128xf32>
    %21 = arith.subf %20, %19 : vector<2x8x128xf32>
    %22 = math.exp %21 : vector<2x8x128xf32>
    %cst_14 = arith.constant 1.000000e+00 : f32
    %23 = vector.broadcast %cst_14 : f32 to vector<2x8x128xf32>
    %24 = arith.addf %23, %22 : vector<2x8x128xf32>
    %25 = math.log %24 : vector<2x8x128xf32>
    %26 = arith.addf %18, %25 : vector<2x8x128xf32>
    %27 = arith.mulf %16, %26 : vector<2x8x128xf32>
    %28 = math.log %27 : vector<2x8x128xf32>
    %cst_15 = arith.constant 1.000000e+00 : f32
    %29 = vector.broadcast %cst_15 : f32 to vector<2x8x128xf32>
    %30 = arith.addf %29, %27 : vector<2x8x128xf32>
    %31 = math.log %30 : vector<2x8x128xf32>
    %cst_16 = arith.constant 1.000000e+00 : f32
    %32 = vector.broadcast %cst_16 : f32 to vector<2x8x128xf32>
    %33 = arith.addf %32, %16 : vector<2x8x128xf32>
    %34 = math.log %33 : vector<2x8x128xf32>
    %35 = tpu.reciprocal %16 {approx = true} : vector<2x8x128xf32> -> vector<2x8x128xf32>
    %36 = arith.mulf %16, %35 : vector<2x8x128xf32>
    %cst_17 = arith.constant 2.000000e+00 : f32
    %37 = vector.broadcast %cst_17 : f32 to vector<2x8x128xf32>
    %38 = arith.subf %37, %36 : vector<2x8x128xf32>
    %39 = arith.mulf %35, %38 : vector<2x8x128xf32>
    %40 = arith.addf %39, %4 : vector<2x8x128xf32>
    %41 = arith.mulf %4, %28 : vector<2x8x128xf32>
    %42 = arith.mulf %40, %31 : vector<2x8x128xf32>
    %43 = arith.subf %41, %42 : vector<2x8x128xf32>
    %cst_18 = arith.constant dense<0.000000e+00> : vector<8x128xf32>
    %44 = vector.multi_reduction <add>, %43, %cst_18 [0] : vector<2x8x128xf32> to vector<8x128xf32>
    %cst_19 = arith.constant 1.000000e+00 : f32
    %45 = vector.broadcast %cst_19 : f32 to vector<2x8x128xf32>
    %46 = arith.addf %45, %16 : vector<2x8x128xf32>
    %47 = arith.addf %46, %27 : vector<2x8x128xf32>
    %48 = math.log %47 : vector<2x8x128xf32>
    %49 = arith.subf %31, %48 : vector<2x8x128xf32>
    %50 = arith.mulf %40, %49 : vector<2x8x128xf32>
    %51 = math.exp %50 : vector<2x8x128xf32>
    %cst_20 = arith.constant 0.000000e+00 : f32
    %52 = vector.broadcast %cst_20 : f32 to vector<2x8x128xf32>
    %53 = arith.subf %52, %39 : vector<2x8x128xf32>
    %54 = arith.mulf %53, %34 : vector<2x8x128xf32>
    %55 = math.exp %54 : vector<2x8x128xf32>
    %56 = arith.subf %51, %55 : vector<2x8x128xf32>
    %57 = vector.extract_strided_slice %56 {offsets = [0, 0, 0], sizes = [1, 8, 128], strides = [1, 1, 1]} : vector<2x8x128xf32> to vector<1x8x128xf32>
    %58 = vector.shape_cast %57 : vector<1x8x128xf32> to vector<8x128xf32>
    %59 = vector.extract_strided_slice %56 {offsets = [1, 0, 0], sizes = [1, 8, 128], strides = [1, 1, 1]} : vector<2x8x128xf32> to vector<1x8x128xf32>
    %60 = vector.shape_cast %59 : vector<1x8x128xf32> to vector<8x128xf32>
    %61 = arith.mulf %58, %60 : vector<8x128xf32>
    %62 = arith.mulf %3, %61 : vector<8x128xf32>
    %cst_21 = arith.constant 1.000000e+00 : f32
    %63 = vector.broadcast %cst_21 : f32 to vector<8x128xf32>
    %64 = arith.addf %63, %62 : vector<8x128xf32>
    %cst_22 = arith.constant 9.99999993E-9 : f32
    %65 = vector.broadcast %cst_22 : f32 to vector<8x128xf32>
    %66 = arith.maximumf %64, %65 : vector<8x128xf32>
    %67 = math.log %66 : vector<8x128xf32>
    %cst_23 = arith.constant 1.000000e+00 : f32
    %68 = vector.broadcast %cst_23 : f32 to vector<2x8x128xf32>
    %69 = arith.addf %68, %4 : vector<2x8x128xf32>
    %cst_24 = arith.constant 1.000000e+00 : f32
    %70 = vector.broadcast %cst_24 : f32 to vector<2x8x128xf32>
    %71 = arith.subf %69, %70 : vector<2x8x128xf32>
    %cst_25 = arith.constant 1.000000e+00 : f32
    %72 = vector.broadcast %cst_25 : f32 to vector<2x8x128xf32>
    %73 = arith.mulf %72, %71 : vector<2x8x128xf32>
    %cst_26 = arith.constant 60.4583321 : f32
    %74 = vector.broadcast %cst_26 : f32 to vector<2x8x128xf32>
    %75 = arith.addf %73, %74 : vector<2x8x128xf32>
    %76 = arith.mulf %75, %71 : vector<2x8x128xf32>
    %cst_27 = arith.constant 1599.04248 : f32
    %77 = vector.broadcast %cst_27 : f32 to vector<2x8x128xf32>
    %78 = arith.addf %76, %77 : vector<2x8x128xf32>
    %79 = arith.mulf %78, %71 : vector<2x8x128xf32>
    %cst_28 = arith.constant 24165.5098 : f32
    %80 = vector.broadcast %cst_28 : f32 to vector<2x8x128xf32>
    %81 = arith.addf %79, %80 : vector<2x8x128xf32>
    %82 = arith.mulf %81, %71 : vector<2x8x128xf32>
    %cst_29 = arith.constant 228235.219 : f32
    %83 = vector.broadcast %cst_29 : f32 to vector<2x8x128xf32>
    %84 = arith.addf %82, %83 : vector<2x8x128xf32>
    %85 = arith.mulf %84, %71 : vector<2x8x128xf32>
    %cst_30 = arith.constant 1379496.25 : f32
    %86 = vector.broadcast %cst_30 : f32 to vector<2x8x128xf32>
    %87 = arith.addf %85, %86 : vector<2x8x128xf32>
    %88 = arith.mulf %87, %71 : vector<2x8x128xf32>
    %cst_31 = arith.constant 0x4A9F05EA : f32
    %89 = vector.broadcast %cst_31 : f32 to vector<2x8x128xf32>
    %90 = arith.addf %88, %89 : vector<2x8x128xf32>
    %91 = arith.mulf %90, %71 : vector<2x8x128xf32>
    %cst_32 = arith.constant 0x4B2B9D51 : f32
    %92 = vector.broadcast %cst_32 : f32 to vector<2x8x128xf32>
    %93 = arith.addf %91, %92 : vector<2x8x128xf32>
    %94 = arith.mulf %93, %71 : vector<2x8x128xf32>
    %cst_33 = arith.constant 0x4B220ADA : f32
    %95 = vector.broadcast %cst_33 : f32 to vector<2x8x128xf32>
    %96 = arith.addf %94, %95 : vector<2x8x128xf32>
    %cst_34 = arith.constant 1.000000e+00 : f32
    %97 = vector.broadcast %cst_34 : f32 to vector<2x8x128xf32>
    %98 = arith.addf %71, %97 : vector<2x8x128xf32>
    %cst_35 = arith.constant 2.000000e+00 : f32
    %99 = vector.broadcast %cst_35 : f32 to vector<2x8x128xf32>
    %100 = arith.addf %71, %99 : vector<2x8x128xf32>
    %101 = arith.mulf %98, %100 : vector<2x8x128xf32>
    %cst_36 = arith.constant 3.000000e+00 : f32
    %102 = vector.broadcast %cst_36 : f32 to vector<2x8x128xf32>
    %103 = arith.addf %71, %102 : vector<2x8x128xf32>
    %104 = arith.mulf %101, %103 : vector<2x8x128xf32>
    %cst_37 = arith.constant 4.000000e+00 : f32
    %105 = vector.broadcast %cst_37 : f32 to vector<2x8x128xf32>
    %106 = arith.addf %71, %105 : vector<2x8x128xf32>
    %107 = arith.mulf %104, %106 : vector<2x8x128xf32>
    %cst_38 = arith.constant 5.000000e+00 : f32
    %108 = vector.broadcast %cst_38 : f32 to vector<2x8x128xf32>
    %109 = arith.addf %71, %108 : vector<2x8x128xf32>
    %110 = arith.mulf %107, %109 : vector<2x8x128xf32>
    %cst_39 = arith.constant 6.000000e+00 : f32
    %111 = vector.broadcast %cst_39 : f32 to vector<2x8x128xf32>
    %112 = arith.addf %71, %111 : vector<2x8x128xf32>
    %113 = arith.mulf %110, %112 : vector<2x8x128xf32>
    %cst_40 = arith.constant 7.000000e+00 : f32
    %114 = vector.broadcast %cst_40 : f32 to vector<2x8x128xf32>
    %115 = arith.addf %71, %114 : vector<2x8x128xf32>
    %116 = arith.mulf %113, %115 : vector<2x8x128xf32>
    %cst_41 = arith.constant 8.000000e+00 : f32
    %117 = vector.broadcast %cst_41 : f32 to vector<2x8x128xf32>
    %118 = arith.addf %71, %117 : vector<2x8x128xf32>
    %119 = arith.mulf %116, %118 : vector<2x8x128xf32>
    %120 = tpu.reciprocal %119 {approx = true} : vector<2x8x128xf32> -> vector<2x8x128xf32>
    %121 = arith.mulf %119, %120 : vector<2x8x128xf32>
    %cst_42 = arith.constant 2.000000e+00 : f32
    %122 = vector.broadcast %cst_42 : f32 to vector<2x8x128xf32>
    %123 = arith.subf %122, %121 : vector<2x8x128xf32>
    %124 = arith.mulf %120, %123 : vector<2x8x128xf32>
    %125 = arith.mulf %96, %124 : vector<2x8x128xf32>
    %cst_43 = arith.constant 7.500000e+00 : f32
    %126 = vector.broadcast %cst_43 : f32 to vector<2x8x128xf32>
    %127 = arith.addf %71, %126 : vector<2x8x128xf32>
    %cst_44 = arith.constant 5.000000e-01 : f32
    %128 = vector.broadcast %cst_44 : f32 to vector<2x8x128xf32>
    %129 = arith.addf %71, %128 : vector<2x8x128xf32>
    %130 = math.log %127 : vector<2x8x128xf32>
    %131 = arith.mulf %129, %130 : vector<2x8x128xf32>
    %cst_45 = arith.constant 0.918938517 : f32
    %132 = vector.broadcast %cst_45 : f32 to vector<2x8x128xf32>
    %133 = arith.addf %132, %131 : vector<2x8x128xf32>
    %134 = arith.subf %133, %127 : vector<2x8x128xf32>
    %135 = math.log %125 : vector<2x8x128xf32>
    %136 = arith.addf %134, %135 : vector<2x8x128xf32>
    %cst_46 = arith.constant 1.000000e+00 : f32
    %137 = vector.broadcast %cst_46 : f32 to vector<2x8x128xf32>
    %138 = arith.subf %39, %137 : vector<2x8x128xf32>
    %cst_47 = arith.constant 1.000000e+00 : f32
    %139 = vector.broadcast %cst_47 : f32 to vector<2x8x128xf32>
    %140 = arith.mulf %139, %138 : vector<2x8x128xf32>
    %cst_48 = arith.constant 60.4583321 : f32
    %141 = vector.broadcast %cst_48 : f32 to vector<2x8x128xf32>
    %142 = arith.addf %140, %141 : vector<2x8x128xf32>
    %143 = arith.mulf %142, %138 : vector<2x8x128xf32>
    %cst_49 = arith.constant 1599.04248 : f32
    %144 = vector.broadcast %cst_49 : f32 to vector<2x8x128xf32>
    %145 = arith.addf %143, %144 : vector<2x8x128xf32>
    %146 = arith.mulf %145, %138 : vector<2x8x128xf32>
    %cst_50 = arith.constant 24165.5098 : f32
    %147 = vector.broadcast %cst_50 : f32 to vector<2x8x128xf32>
    %148 = arith.addf %146, %147 : vector<2x8x128xf32>
    %149 = arith.mulf %148, %138 : vector<2x8x128xf32>
    %cst_51 = arith.constant 228235.219 : f32
    %150 = vector.broadcast %cst_51 : f32 to vector<2x8x128xf32>
    %151 = arith.addf %149, %150 : vector<2x8x128xf32>
    %152 = arith.mulf %151, %138 : vector<2x8x128xf32>
    %cst_52 = arith.constant 1379496.25 : f32
    %153 = vector.broadcast %cst_52 : f32 to vector<2x8x128xf32>
    %154 = arith.addf %152, %153 : vector<2x8x128xf32>
    %155 = arith.mulf %154, %138 : vector<2x8x128xf32>
    %cst_53 = arith.constant 0x4A9F05EA : f32
    %156 = vector.broadcast %cst_53 : f32 to vector<2x8x128xf32>
    %157 = arith.addf %155, %156 : vector<2x8x128xf32>
    %158 = arith.mulf %157, %138 : vector<2x8x128xf32>
    %cst_54 = arith.constant 0x4B2B9D51 : f32
    %159 = vector.broadcast %cst_54 : f32 to vector<2x8x128xf32>
    %160 = arith.addf %158, %159 : vector<2x8x128xf32>
    %161 = arith.mulf %160, %138 : vector<2x8x128xf32>
    %cst_55 = arith.constant 0x4B220ADA : f32
    %162 = vector.broadcast %cst_55 : f32 to vector<2x8x128xf32>
    %163 = arith.addf %161, %162 : vector<2x8x128xf32>
    %cst_56 = arith.constant 1.000000e+00 : f32
    %164 = vector.broadcast %cst_56 : f32 to vector<2x8x128xf32>
    %165 = arith.addf %138, %164 : vector<2x8x128xf32>
    %cst_57 = arith.constant 2.000000e+00 : f32
    %166 = vector.broadcast %cst_57 : f32 to vector<2x8x128xf32>
    %167 = arith.addf %138, %166 : vector<2x8x128xf32>
    %168 = arith.mulf %165, %167 : vector<2x8x128xf32>
    %cst_58 = arith.constant 3.000000e+00 : f32
    %169 = vector.broadcast %cst_58 : f32 to vector<2x8x128xf32>
    %170 = arith.addf %138, %169 : vector<2x8x128xf32>
    %171 = arith.mulf %168, %170 : vector<2x8x128xf32>
    %cst_59 = arith.constant 4.000000e+00 : f32
    %172 = vector.broadcast %cst_59 : f32 to vector<2x8x128xf32>
    %173 = arith.addf %138, %172 : vector<2x8x128xf32>
    %174 = arith.mulf %171, %173 : vector<2x8x128xf32>
    %cst_60 = arith.constant 5.000000e+00 : f32
    %175 = vector.broadcast %cst_60 : f32 to vector<2x8x128xf32>
    %176 = arith.addf %138, %175 : vector<2x8x128xf32>
    %177 = arith.mulf %174, %176 : vector<2x8x128xf32>
    %cst_61 = arith.constant 6.000000e+00 : f32
    %178 = vector.broadcast %cst_61 : f32 to vector<2x8x128xf32>
    %179 = arith.addf %138, %178 : vector<2x8x128xf32>
    %180 = arith.mulf %177, %179 : vector<2x8x128xf32>
    %cst_62 = arith.constant 7.000000e+00 : f32
    %181 = vector.broadcast %cst_62 : f32 to vector<2x8x128xf32>
    %182 = arith.addf %138, %181 : vector<2x8x128xf32>
    %183 = arith.mulf %180, %182 : vector<2x8x128xf32>
    %cst_63 = arith.constant 8.000000e+00 : f32
    %184 = vector.broadcast %cst_63 : f32 to vector<2x8x128xf32>
    %185 = arith.addf %138, %184 : vector<2x8x128xf32>
    %186 = arith.mulf %183, %185 : vector<2x8x128xf32>
    %187 = tpu.reciprocal %186 {approx = true} : vector<2x8x128xf32> -> vector<2x8x128xf32>
    %188 = arith.mulf %186, %187 : vector<2x8x128xf32>
    %cst_64 = arith.constant 2.000000e+00 : f32
    %189 = vector.broadcast %cst_64 : f32 to vector<2x8x128xf32>
    %190 = arith.subf %189, %188 : vector<2x8x128xf32>
    %191 = arith.mulf %187, %190 : vector<2x8x128xf32>
    %192 = arith.mulf %163, %191 : vector<2x8x128xf32>
    %cst_65 = arith.constant 7.500000e+00 : f32
    %193 = vector.broadcast %cst_65 : f32 to vector<2x8x128xf32>
    %194 = arith.addf %138, %193 : vector<2x8x128xf32>
    %cst_66 = arith.constant 5.000000e-01 : f32
    %195 = vector.broadcast %cst_66 : f32 to vector<2x8x128xf32>
    %196 = arith.addf %138, %195 : vector<2x8x128xf32>
    %197 = math.log %194 : vector<2x8x128xf32>
    %198 = arith.mulf %196, %197 : vector<2x8x128xf32>
    %cst_67 = arith.constant 0.918938517 : f32
    %199 = vector.broadcast %cst_67 : f32 to vector<2x8x128xf32>
    %200 = arith.addf %199, %198 : vector<2x8x128xf32>
    %201 = arith.subf %200, %194 : vector<2x8x128xf32>
    %202 = math.log %192 : vector<2x8x128xf32>
    %203 = arith.addf %201, %202 : vector<2x8x128xf32>
    %204 = arith.addf %136, %203 : vector<2x8x128xf32>
    %cst_68 = arith.constant 1.000000e+00 : f32
    %205 = vector.broadcast %cst_68 : f32 to vector<2x8x128xf32>
    %206 = arith.subf %40, %205 : vector<2x8x128xf32>
    %cst_69 = arith.constant 1.000000e+00 : f32
    %207 = vector.broadcast %cst_69 : f32 to vector<2x8x128xf32>
    %208 = arith.mulf %207, %206 : vector<2x8x128xf32>
    %cst_70 = arith.constant 60.4583321 : f32
    %209 = vector.broadcast %cst_70 : f32 to vector<2x8x128xf32>
    %210 = arith.addf %208, %209 : vector<2x8x128xf32>
    %211 = arith.mulf %210, %206 : vector<2x8x128xf32>
    %cst_71 = arith.constant 1599.04248 : f32
    %212 = vector.broadcast %cst_71 : f32 to vector<2x8x128xf32>
    %213 = arith.addf %211, %212 : vector<2x8x128xf32>
    %214 = arith.mulf %213, %206 : vector<2x8x128xf32>
    %cst_72 = arith.constant 24165.5098 : f32
    %215 = vector.broadcast %cst_72 : f32 to vector<2x8x128xf32>
    %216 = arith.addf %214, %215 : vector<2x8x128xf32>
    %217 = arith.mulf %216, %206 : vector<2x8x128xf32>
    %cst_73 = arith.constant 228235.219 : f32
    %218 = vector.broadcast %cst_73 : f32 to vector<2x8x128xf32>
    %219 = arith.addf %217, %218 : vector<2x8x128xf32>
    %220 = arith.mulf %219, %206 : vector<2x8x128xf32>
    %cst_74 = arith.constant 1379496.25 : f32
    %221 = vector.broadcast %cst_74 : f32 to vector<2x8x128xf32>
    %222 = arith.addf %220, %221 : vector<2x8x128xf32>
    %223 = arith.mulf %222, %206 : vector<2x8x128xf32>
    %cst_75 = arith.constant 0x4A9F05EA : f32
    %224 = vector.broadcast %cst_75 : f32 to vector<2x8x128xf32>
    %225 = arith.addf %223, %224 : vector<2x8x128xf32>
    %226 = arith.mulf %225, %206 : vector<2x8x128xf32>
    %cst_76 = arith.constant 0x4B2B9D51 : f32
    %227 = vector.broadcast %cst_76 : f32 to vector<2x8x128xf32>
    %228 = arith.addf %226, %227 : vector<2x8x128xf32>
    %229 = arith.mulf %228, %206 : vector<2x8x128xf32>
    %cst_77 = arith.constant 0x4B220ADA : f32
    %230 = vector.broadcast %cst_77 : f32 to vector<2x8x128xf32>
    %231 = arith.addf %229, %230 : vector<2x8x128xf32>
    %cst_78 = arith.constant 1.000000e+00 : f32
    %232 = vector.broadcast %cst_78 : f32 to vector<2x8x128xf32>
    %233 = arith.addf %206, %232 : vector<2x8x128xf32>
    %cst_79 = arith.constant 2.000000e+00 : f32
    %234 = vector.broadcast %cst_79 : f32 to vector<2x8x128xf32>
    %235 = arith.addf %206, %234 : vector<2x8x128xf32>
    %236 = arith.mulf %233, %235 : vector<2x8x128xf32>
    %cst_80 = arith.constant 3.000000e+00 : f32
    %237 = vector.broadcast %cst_80 : f32 to vector<2x8x128xf32>
    %238 = arith.addf %206, %237 : vector<2x8x128xf32>
    %239 = arith.mulf %236, %238 : vector<2x8x128xf32>
    %cst_81 = arith.constant 4.000000e+00 : f32
    %240 = vector.broadcast %cst_81 : f32 to vector<2x8x128xf32>
    %241 = arith.addf %206, %240 : vector<2x8x128xf32>
    %242 = arith.mulf %239, %241 : vector<2x8x128xf32>
    %cst_82 = arith.constant 5.000000e+00 : f32
    %243 = vector.broadcast %cst_82 : f32 to vector<2x8x128xf32>
    %244 = arith.addf %206, %243 : vector<2x8x128xf32>
    %245 = arith.mulf %242, %244 : vector<2x8x128xf32>
    %cst_83 = arith.constant 6.000000e+00 : f32
    %246 = vector.broadcast %cst_83 : f32 to vector<2x8x128xf32>
    %247 = arith.addf %206, %246 : vector<2x8x128xf32>
    %248 = arith.mulf %245, %247 : vector<2x8x128xf32>
    %cst_84 = arith.constant 7.000000e+00 : f32
    %249 = vector.broadcast %cst_84 : f32 to vector<2x8x128xf32>
    %250 = arith.addf %206, %249 : vector<2x8x128xf32>
    %251 = arith.mulf %248, %250 : vector<2x8x128xf32>
    %cst_85 = arith.constant 8.000000e+00 : f32
    %252 = vector.broadcast %cst_85 : f32 to vector<2x8x128xf32>
    %253 = arith.addf %206, %252 : vector<2x8x128xf32>
    %254 = arith.mulf %251, %253 : vector<2x8x128xf32>
    %255 = tpu.reciprocal %254 {approx = true} : vector<2x8x128xf32> -> vector<2x8x128xf32>
    %256 = arith.mulf %254, %255 : vector<2x8x128xf32>
    %cst_86 = arith.constant 2.000000e+00 : f32
    %257 = vector.broadcast %cst_86 : f32 to vector<2x8x128xf32>
    %258 = arith.subf %257, %256 : vector<2x8x128xf32>
    %259 = arith.mulf %255, %258 : vector<2x8x128xf32>
    %260 = arith.mulf %231, %259 : vector<2x8x128xf32>
    %cst_87 = arith.constant 7.500000e+00 : f32
    %261 = vector.broadcast %cst_87 : f32 to vector<2x8x128xf32>
    %262 = arith.addf %206, %261 : vector<2x8x128xf32>
    %cst_88 = arith.constant 5.000000e-01 : f32
    %263 = vector.broadcast %cst_88 : f32 to vector<2x8x128xf32>
    %264 = arith.addf %206, %263 : vector<2x8x128xf32>
    %265 = math.log %262 : vector<2x8x128xf32>
    %266 = arith.mulf %264, %265 : vector<2x8x128xf32>
    %cst_89 = arith.constant 0.918938517 : f32
    %267 = vector.broadcast %cst_89 : f32 to vector<2x8x128xf32>
    %268 = arith.addf %267, %266 : vector<2x8x128xf32>
    %269 = arith.subf %268, %262 : vector<2x8x128xf32>
    %270 = math.log %260 : vector<2x8x128xf32>
    %271 = arith.addf %269, %270 : vector<2x8x128xf32>
    %272 = arith.subf %204, %271 : vector<2x8x128xf32>
    %cst_90 = arith.constant dense<0.000000e+00> : vector<8x128xf32>
    %273 = vector.multi_reduction <add>, %272, %cst_90 [0] : vector<2x8x128xf32> to vector<8x128xf32>
    %274 = arith.subf %44, %273 : vector<8x128xf32>
    %275 = arith.addf %274, %67 : vector<8x128xf32>
    %276 = arith.mulf %275, %6 : vector<8x128xf32>
    %277 = vector.shape_cast %276 : vector<8x128xf32> to vector<1x8x128xf32>
    %cst_91 = arith.constant dense<0.000000e+00> : vector<8x128xf32>
    %278 = vector.multi_reduction <add>, %277, %cst_91 [0] : vector<1x8x128xf32> to vector<8x128xf32>
    %279 = vector.shape_cast %278 : vector<8x128xf32> to vector<1x8x128xf32>
    %c0_92 = arith.constant 0 : index
    %c0_93 = arith.constant 0 : index
    %c0_94 = arith.constant 0 : index
    %280 = vector.load %arg2[%c0_92, %c0_93, %c0_94] : memref<1x8x128xf32, #tpu.memory_space<vmem>>, vector<1x8x128xf32>
    tpu.vector_store %arg2[%c0_92, %c0_93, %c0_94], %279 {strides = array<i32>} : memref<1x8x128xf32, #tpu.memory_space<vmem>>, vector<1x8x128xf32>,
    return
  }
  func.func @transform_0(%arg0: i32) -> (i32, i32, i32) {
    %c0_i32 = arith.constant 0 : i32
    %c0_i32_0 = arith.constant 0 : i32
    %c0_i32_1 = arith.constant 0 : i32
    return %c0_i32, %arg0, %c0_i32_0 : i32, i32, i32
  }
  func.func @transform_1(%arg0: i32) -> (i32, i32, i32) {
    %c0_i32 = arith.constant 0 : i32
    %c0_i32_0 = arith.constant 0 : i32
    %c0_i32_1 = arith.constant 0 : i32
    return %arg0, %c0_i32, %c0_i32_0 : i32, i32, i32
  }
}

</mosaic_0001>

<llo_original>
// kernel: tpu_custom_call.1
$region0: #{tpu_custom_call.1}
  #allocation0 [shape = 'u32[]', space=smem, size = 0x4, offset = 0x4, fixed_abs, tag = 'smem constant byte address 0x4 - core index']
  #allocation1 [shape = 'u32[144,128]{1,0:T(1,128)}', space=vmem, size = 0x12000, scoped, tag = 'internal scratch']
  %s0 = inlined_call_operand.hbm [shape: f32[8,8,128], index: 0, kind: input, shape index: {}]
  %s1 = inlined_call_operand.hbm [shape: f32[1,8,128], index: 1, kind: output, shape index: {}]
  %s2 = sld [smem:[#allocation0]]
  $region18: #{tpu_custom_call.1} parent=0
    _
  %s4 = ssub.s32 1, %s2
  %s5 = scalar_select 0, %s4, %s2
  $region1: #{tpu_custom_call.1} parent=0
    #allocation2 [shape = 'u8[32768]{0}', space=vmem, size = 0x8000, scoped, tag = 'input window, operand 0, single buffered']
    #allocation3 [shape = 's32[1]{0}', space=sflag, size = 0x4, scoped, tag = 'scoped memory for tpu_custom_call.1']
    #allocation4 [shape = 's32[1]{0}', space=sflag, size = 0x4, scoped, tag = 'scoped memory for tpu_custom_call.1']
    #allocation5 [shape = 'u8[4096]{0}', space=vmem, size = 0x1000, scoped, tag = 'output window, operand 0, single buffered']
    %6 = vsyncpa [#allocation3], 0
    %7 = vsyncpa [#allocation4], 0
    // Predicated region
    $region2: #{tpu_custom_call.1} parent=1 // pred_check
      _
    $region3: #{tpu_custom_call.1} parent=1 // pred_check_branch
      %9 = sbr.rel (0) target = $region5
    $region4: #{tpu_custom_call.1} parent=1 // pred_region
      %s11 = ssub.s32 1024, 1024
      %12 = vsyncadd [#allocation3], %s11
      %s13 = sshll.u32 [#allocation2], 4
      %s14 = int_to_ptr.vmem [resolvable:$true] %s13
      %19 = dma.hbm_to_vmem [thread:$0]  %s0, 1024, %s14, [#allocation3], 128, 128, 8
    $region5: #{tpu_custom_call.1} parent=1 // pred_fallthru
      _
    // Predicated region
    $region6: #{tpu_custom_call.1} parent=1 // pred_check
      _
    $region7: #{tpu_custom_call.1} parent=1 // pred_check_branch
      %21 = sbr.rel (0) target = $region9
    $region8: #{tpu_custom_call.1} parent=1 // pred_region
      %22 = dma.done [#allocation3], 1024
    $region9: #{tpu_custom_call.1} parent=1 // pred_fallthru
      _
    %v23 = vld [vmem:[#allocation2] sm:$0xff]
    %v24 = vld [vmem:[#allocation2 + $0x8] sm:$0xff]
    %s25 = scalar_lea.vmem [#allocation2], 16
    %v26 = vld [vmem:[%s25] sm:$0xff]
    %v27 = vld [vmem:[%s25 + $0x8] sm:$0xff]
    %s28 = scalar_lea.vmem [#allocation2], 32
    %v29 = vld [vmem:[%s28] sm:$0xff]
    %s30 = scalar_lea.vmem [#allocation2], 40
    %v31 = vld [vmem:[%s30] sm:$0xff]
    %v32 = vld [vmem:[%s30 + $0x8] sm:$0xff]
    %s33 = scalar_lea.vmem [#allocation2], 56
    %v34 = vld [vmem:[%s33] sm:$0xff]
    %v35 = vmax.f32 %v23, 0.0
    %v36 = vmax.f32 %v24, 0.0
    %v37 = vand.u32 2147483647, %v23
    %v38 = vand.u32 2147483647, %v24
    %v39 = vsub.f32 0.0, %v37
    %v40 = vsub.f32 0.0, %v38
    %v41 = vmul.f32 %v39, 1.442695
    %v42 = vpow.pop %v41
    %v43 = vmul.f32 %v40, 1.442695
    %v44 = vpow.pop %v43
    %v45 = vadd.f32 %v42, 1.0
    %v46 = vadd.f32 %v44, 1.0
    %v47 = vlog2.pop %v45
    %v48 = vmul.f32 %v47, 0.6931472
    %v49 = vlog2.pop %v46
    %v50 = vmul.f32 %v49, 0.6931472
    %v51 = vadd.f32 %v35, %v48
    %v52 = vadd.f32 %v36, %v50
    %v53 = vmax.f32 %v26, 0.0
    %v54 = vmax.f32 %v27, 0.0
    %v55 = vand.u32 2147483647, %v26
    %v56 = vand.u32 2147483647, %v27
    %v57 = vsub.f32 0.0, %v55
    %v58 = vsub.f32 0.0, %v56
    %v59 = vmul.f32 %v57, 1.442695
    %v60 = vpow.pop %v59
    %v61 = vmul.f32 %v58, 1.442695
    %v62 = vpow.pop %v61
    %v63 = vadd.f32 %v60, 1.0
    %v64 = vadd.f32 %v62, 1.0
    %v65 = vlog2.pop %v63
    %v66 = vmul.f32 %v65, 0.6931472
    %v67 = vlog2.pop %v64
    %v68 = vmul.f32 %v67, 0.6931472
    %v69 = vadd.f32 %v53, %v66
    %v70 = vadd.f32 %v54, %v68
    %v71 = vmul.f32 %v51, %v69
    %v72 = vmul.f32 %v52, %v70
    %v73 = vlog2.pop %v71
    %v74 = vmul.f32 %v73, 0.6931472
    %v75 = vlog2.pop %v72
    %v76 = vmul.f32 %v75, 0.6931472
    %v77 = vadd.f32 %v71, 1.0
    %v78 = vadd.f32 %v72, 1.0
    %v79 = vlog2.pop %v77
    %v80 = vmul.f32 %v79, 0.6931472
    %v81 = vlog2.pop %v78
    %v82 = vmul.f32 %v81, 0.6931472
    %v83 = vadd.f32 %v51, 1.0
    %v84 = vadd.f32 %v52, 1.0
    %v85 = vlog2.pop %v83
    %v86 = vmul.f32 %v85, 0.6931472
    %v87 = vlog2.pop %v84
    %v88 = vmul.f32 %v87, 0.6931472
    %v89 = vrcp.pop %v51
    %v90 = vrcp.pop %v52
    %v91 = vmul.f32 %v51, %v89
    %v92 = vmul.f32 %v52, %v90
    %v93 = vsub.f32 2.0, %v91
    %v94 = vsub.f32 2.0, %v92
    %v95 = vmul.f32 %v89, %v93
    %v96 = vmul.f32 %v90, %v94
    %v97 = vadd.f32 %v95, %v31
    %v98 = vadd.f32 %v96, %v32
    %v99 = vmul.f32 %v31, %v74
    %v100 = vmul.f32 %v32, %v76
    %v101 = vmul.f32 %v97, %v80
    %v102 = vmul.f32 %v98, %v82
    %v103 = vsub.f32 %v99, %v101
    %v104 = vsub.f32 %v100, %v102
    %v105 = vadd.f32 %v103, %v104
    %v106 = vadd.f32 %v83, %v71
    %v107 = vadd.f32 %v84, %v72
    %v108 = vlog2.pop %v106
    %v109 = vmul.f32 %v108, 0.6931472
    %v110 = vlog2.pop %v107
    %v111 = vmul.f32 %v110, 0.6931472
    %v112 = vsub.f32 %v80, %v109
    %v113 = vsub.f32 %v82, %v111
    %v114 = vmul.f32 %v97, %v112
    %v115 = vmul.f32 %v98, %v113
    %v116 = vmul.f32 %v114, 1.442695
    %v117 = vpow.pop %v116
    %v118 = vmul.f32 %v115, 1.442695
    %v119 = vpow.pop %v118
    %v120 = vsub.f32 0.0, %v95
    %v121 = vsub.f32 0.0, %v96
    %v122 = vmul.f32 %v120, %v86
    %v123 = vmul.f32 %v121, %v88
    %v124 = vmul.f32 %v122, 1.442695
    %v125 = vpow.pop %v124
    %v126 = vmul.f32 %v123, 1.442695
    %v127 = vpow.pop %v126
    %v128 = vsub.f32 %v117, %v125
    %v129 = vsub.f32 %v119, %v127
    %v130 = vmul.f32 %v128, %v129
    %v131 = vmul.f32 %v29, %v130
    %v132 = vadd.f32 %v131, 1.0
    %v133 = vmax.f32 %v132, 1e-08
    %v134 = vlog2.pop %v133
    %v135 = vmul.f32 %v134, 0.6931472
    %v136 = vadd.f32 %v31, 1.0
    %v137 = vadd.f32 %v32, 1.0
    %v138 = vsub.f32 %v136, 1.0
    %v139 = vsub.f32 %v137, 1.0
    %v140 = vadd.f32 %v138, 60.458332
    %v141 = vadd.f32 %v139, 60.458332
    %v142 = vmul.f32 %v140, %v138
    %v143 = vmul.f32 %v141, %v139
    %v144 = vadd.f32 %v142, 1599.0425
    %v145 = vadd.f32 %v143, 1599.0425
    %v146 = vmul.f32 %v144, %v138
    %v147 = vmul.f32 %v145, %v139
    %v148 = vadd.f32 %v146, 24165.51
    %v149 = vadd.f32 %v147, 24165.51
    %v150 = vmul.f32 %v148, %v138
    %v151 = vmul.f32 %v149, %v139
    %v152 = vadd.f32 %v150, 228235.22
    %v153 = vadd.f32 %v151, 228235.22
    %v154 = vmul.f32 %v152, %v138
    %v155 = vmul.f32 %v153, %v139
    %v156 = vadd.f32 %v154, 1379496.3
    %v157 = vadd.f32 %v155, 1379496.3
    %v158 = vmul.f32 %v156, %v138
    %v159 = vmul.f32 %v157, %v139
    %v160 = vadd.f32 %v158, 5210869.0
    %v161 = vadd.f32 %v159, 5210869.0
    %v162 = vmul.f32 %v160, %v138
    %v163 = vmul.f32 %v161, %v139
    %v164 = vadd.f32 %v162, 11246929.0
    %v165 = vadd.f32 %v163, 11246929.0
    %v166 = vmul.f32 %v164, %v138
    %v167 = vmul.f32 %v165, %v139
    %v168 = vadd.f32 %v166, 10619610.0
    %v169 = vadd.f32 %v167, 10619610.0
    %v170 = vadd.f32 %v138, 1.0
    %v171 = vadd.f32 %v139, 1.0
    %v172 = vadd.f32 %v138, 2.0
    %v173 = vadd.f32 %v139, 2.0
    %v174 = vmul.f32 %v170, %v172
    %v175 = vmul.f32 %v171, %v173
    %v176 = vadd.f32 %v138, 3.0
    %v177 = vadd.f32 %v139, 3.0
    %v178 = vmul.f32 %v174, %v176
    %v179 = vmul.f32 %v175, %v177
    %v180 = vadd.f32 %v138, 4.0
    %v181 = vadd.f32 %v139, 4.0
    %v182 = vmul.f32 %v178, %v180
    %v183 = vmul.f32 %v179, %v181
    %v184 = vadd.f32 %v138, 5.0
    %v185 = vadd.f32 %v139, 5.0
    %v186 = vmul.f32 %v182, %v184
    %v187 = vmul.f32 %v183, %v185
    %v188 = vadd.f32 %v138, 6.0
    %v189 = vadd.f32 %v139, 6.0
    %v190 = vmul.f32 %v186, %v188
    %v191 = vmul.f32 %v187, %v189
    %v192 = vadd.f32 %v138, 7.0
    %v193 = vadd.f32 %v139, 7.0
    %v194 = vmul.f32 %v190, %v192
    %v195 = vmul.f32 %v191, %v193
    %v196 = vadd.f32 %v138, 8.0
    %v197 = vadd.f32 %v139, 8.0
    %v198 = vmul.f32 %v194, %v196
    %v199 = vmul.f32 %v195, %v197
    %v200 = vrcp.pop %v198
    %v201 = vrcp.pop %v199
    %v202 = vmul.f32 %v198, %v200
    %v203 = vmul.f32 %v199, %v201
    %v204 = vsub.f32 2.0, %v202
    %v205 = vsub.f32 2.0, %v203
    %v206 = vmul.f32 %v200, %v204
    %v207 = vmul.f32 %v201, %v205
    %v208 = vmul.f32 %v168, %v206
    %v209 = vmul.f32 %v169, %v207
    %v210 = vadd.f32 %v138, 7.5
    %v211 = vadd.f32 %v139, 7.5
    %v212 = vadd.f32 %v138, 0.5
    %v213 = vadd.f32 %v139, 0.5
    %v214 = vlog2.pop %v210
    %v215 = vmul.f32 %v214, 0.6931472
    %v216 = vlog2.pop %v211
    %v217 = vmul.f32 %v216, 0.6931472
    %v218 = vmul.f32 %v212, %v215
    %v219 = vmul.f32 %v213, %v217
    %v220 = vadd.f32 %v218, 0.9189385
    %v221 = vadd.f32 %v219, 0.9189385
    %v222 = vsub.f32 %v220, %v210
    %v223 = vsub.f32 %v221, %v211
    %v224 = vlog2.pop %v208
    %v225 = vmul.f32 %v224, 0.6931472
    %v226 = vlog2.pop %v209
    %v227 = vmul.f32 %v226, 0.6931472
    %v228 = vadd.f32 %v222, %v225
    %v229 = vadd.f32 %v223, %v227
    %v230 = vsub.f32 %v95, 1.0
    %v231 = vsub.f32 %v96, 1.0
    %v232 = vadd.f32 %v230, 60.458332
    %v233 = vadd.f32 %v231, 60.458332
    %v234 = vmul.f32 %v232, %v230
    %v235 = vmul.f32 %v233, %v231
    %v236 = vadd.f32 %v234, 1599.0425
    %v237 = vadd.f32 %v235, 1599.0425
    %v238 = vmul.f32 %v236, %v230
    %v239 = vmul.f32 %v237, %v231
    %v240 = vadd.f32 %v238, 24165.51
    %v241 = vadd.f32 %v239, 24165.51
    %v242 = vmul.f32 %v240, %v230
    %v243 = vmul.f32 %v241, %v231
    %v244 = vadd.f32 %v242, 228235.22
    %v245 = vadd.f32 %v243, 228235.22
    %v246 = vmul.f32 %v244, %v230
    %v247 = vmul.f32 %v245, %v231
    %v248 = vadd.f32 %v246, 1379496.3
    %v249 = vadd.f32 %v247, 1379496.3
    %v250 = vmul.f32 %v248, %v230
    %v251 = vmul.f32 %v249, %v231
    %v252 = vadd.f32 %v250, 5210869.0
    %v253 = vadd.f32 %v251, 5210869.0
    %v254 = vmul.f32 %v252, %v230
    %v255 = vmul.f32 %v253, %v231
    %v256 = vadd.f32 %v254, 11246929.0
    %v257 = vadd.f32 %v255, 11246929.0
    %v258 = vmul.f32 %v256, %v230
    %v259 = vmul.f32 %v257, %v231
    %v260 = vadd.f32 %v258, 10619610.0
    %v261 = vadd.f32 %v259, 10619610.0
    %v262 = vadd.f32 %v230, 1.0
    %v263 = vadd.f32 %v231, 1.0
    %v264 = vadd.f32 %v230, 2.0
    %v265 = vadd.f32 %v231, 2.0
    %v266 = vmul.f32 %v262, %v264
    %v267 = vmul.f32 %v263, %v265
    %v268 = vadd.f32 %v230, 3.0
    %v269 = vadd.f32 %v231, 3.0
    %v270 = vmul.f32 %v266, %v268
    %v271 = vmul.f32 %v267, %v269
    %v272 = vadd.f32 %v230, 4.0
    %v273 = vadd.f32 %v231, 4.0
    %v274 = vmul.f32 %v270, %v272
    %v275 = vmul.f32 %v271, %v273
    %v276 = vadd.f32 %v230, 5.0
    %v277 = vadd.f32 %v231, 5.0
    %v278 = vmul.f32 %v274, %v276
    %v279 = vmul.f32 %v275, %v277
    %v280 = vadd.f32 %v230, 6.0
    %v281 = vadd.f32 %v231, 6.0
    %v282 = vmul.f32 %v278, %v280
    %v283 = vmul.f32 %v279, %v281
    %v284 = vadd.f32 %v230, 7.0
    %v285 = vadd.f32 %v231, 7.0
    %v286 = vmul.f32 %v282, %v284
    %v287 = vmul.f32 %v283, %v285
    %v288 = vadd.f32 %v230, 8.0
    %v289 = vadd.f32 %v231, 8.0
    %v290 = vmul.f32 %v286, %v288
    %v291 = vmul.f32 %v287, %v289
    %v292 = vrcp.pop %v290
    %v293 = vrcp.pop %v291
    %v294 = vmul.f32 %v290, %v292
    %v295 = vmul.f32 %v291, %v293
    %v296 = vsub.f32 2.0, %v294
    %v297 = vsub.f32 2.0, %v295
    %v298 = vmul.f32 %v292, %v296
    %v299 = vmul.f32 %v293, %v297
    %v300 = vmul.f32 %v260, %v298
    %v301 = vmul.f32 %v261, %v299
    %v302 = vadd.f32 %v230, 7.5
    %v303 = vadd.f32 %v231, 7.5
    %v304 = vadd.f32 %v230, 0.5
    %v305 = vadd.f32 %v231, 0.5
    %v306 = vlog2.pop %v302
    %v307 = vmul.f32 %v306, 0.6931472
    %v308 = vlog2.pop %v303
    %v309 = vmul.f32 %v308, 0.6931472
    %v310 = vmul.f32 %v304, %v307
    %v311 = vmul.f32 %v305, %v309
    %v312 = vadd.f32 %v310, 0.9189385
    %v313 = vadd.f32 %v311, 0.9189385
    %v314 = vsub.f32 %v312, %v302
    %v315 = vsub.f32 %v313, %v303
    %v316 = vlog2.pop %v300
    %v317 = vmul.f32 %v316, 0.6931472
    %v318 = vlog2.pop %v301
    %v319 = vmul.f32 %v318, 0.6931472
    %v320 = vadd.f32 %v314, %v317
    %v321 = vadd.f32 %v315, %v319
    %v322 = vadd.f32 %v228, %v320
    %v323 = vadd.f32 %v229, %v321
    %v324 = vsub.f32 %v97, 1.0
    %v325 = vsub.f32 %v98, 1.0
    %v326 = vadd.f32 %v324, 60.458332
    %v327 = vadd.f32 %v325, 60.458332
    %v328 = vmul.f32 %v326, %v324
    %v329 = vmul.f32 %v327, %v325
    %v330 = vadd.f32 %v328, 1599.0425
    %v331 = vadd.f32 %v329, 1599.0425
    %v332 = vmul.f32 %v330, %v324
    %v333 = vmul.f32 %v331, %v325
    %v334 = vadd.f32 %v332, 24165.51
    %v335 = vadd.f32 %v333, 24165.51
    %v336 = vmul.f32 %v334, %v324
    %v337 = vmul.f32 %v335, %v325
    %v338 = vadd.f32 %v336, 228235.22
    %v339 = vadd.f32 %v337, 228235.22
    %v340 = vmul.f32 %v338, %v324
    %v341 = vmul.f32 %v339, %v325
    %v342 = vadd.f32 %v340, 1379496.3
    %v343 = vadd.f32 %v341, 1379496.3
    %v344 = vmul.f32 %v342, %v324
    %v345 = vmul.f32 %v343, %v325
    %v346 = vadd.f32 %v344, 5210869.0
    %v347 = vadd.f32 %v345, 5210869.0
    %v348 = vmul.f32 %v346, %v324
    %v349 = vmul.f32 %v347, %v325
    %v350 = vadd.f32 %v348, 11246929.0
    %v351 = vadd.f32 %v349, 11246929.0
    %v352 = vmul.f32 %v350, %v324
    %v353 = vmul.f32 %v351, %v325
    %v354 = vadd.f32 %v352, 10619610.0
    %v355 = vadd.f32 %v353, 10619610.0
    %v356 = vadd.f32 %v324, 1.0
    %v357 = vadd.f32 %v325, 1.0
    %v358 = vadd.f32 %v324, 2.0
    %v359 = vadd.f32 %v325, 2.0
    %v360 = vmul.f32 %v356, %v358
    %v361 = vmul.f32 %v357, %v359
    %v362 = vadd.f32 %v324, 3.0
    %v363 = vadd.f32 %v325, 3.0
    %v364 = vmul.f32 %v360, %v362
    %v365 = vmul.f32 %v361, %v363
    %v366 = vadd.f32 %v324, 4.0
    %v367 = vadd.f32 %v325, 4.0
    %v368 = vmul.f32 %v364, %v366
    %v369 = vmul.f32 %v365, %v367
    %v370 = vadd.f32 %v324, 5.0
    %v371 = vadd.f32 %v325, 5.0
    %v372 = vmul.f32 %v368, %v370
    %v373 = vmul.f32 %v369, %v371
    %v374 = vadd.f32 %v324, 6.0
    %v375 = vadd.f32 %v325, 6.0
    %v376 = vmul.f32 %v372, %v374
    %v377 = vmul.f32 %v373, %v375
    %v378 = vadd.f32 %v324, 7.0
    %v379 = vadd.f32 %v325, 7.0
    %v380 = vmul.f32 %v376, %v378
    %v381 = vmul.f32 %v377, %v379
    %v382 = vadd.f32 %v324, 8.0
    %v383 = vadd.f32 %v325, 8.0
    %v384 = vmul.f32 %v380, %v382
    %v385 = vmul.f32 %v381, %v383
    %v386 = vrcp.pop %v384
    %v387 = vrcp.pop %v385
    %v388 = vmul.f32 %v384, %v386
    %v389 = vmul.f32 %v385, %v387
    %v390 = vsub.f32 2.0, %v388
    %v391 = vsub.f32 2.0, %v389
    %v392 = vmul.f32 %v386, %v390
    %v393 = vmul.f32 %v387, %v391
    %v394 = vmul.f32 %v354, %v392
    %v395 = vmul.f32 %v355, %v393
    %v396 = vadd.f32 %v324, 7.5
    %v397 = vadd.f32 %v325, 7.5
    %v398 = vadd.f32 %v324, 0.5
    %v399 = vadd.f32 %v325, 0.5
    %v400 = vlog2.pop %v396
    %v401 = vmul.f32 %v400, 0.6931472
    %v402 = vlog2.pop %v397
    %v403 = vmul.f32 %v402, 0.6931472
    %v404 = vmul.f32 %v398, %v401
    %v405 = vmul.f32 %v399, %v403
    %v406 = vadd.f32 %v404, 0.9189385
    %v407 = vadd.f32 %v405, 0.9189385
    %v408 = vsub.f32 %v406, %v396
    %v409 = vsub.f32 %v407, %v397
    %v410 = vlog2.pop %v394
    %v411 = vmul.f32 %v410, 0.6931472
    %v412 = vlog2.pop %v395
    %v413 = vmul.f32 %v412, 0.6931472
    %v414 = vadd.f32 %v408, %v411
    %v415 = vadd.f32 %v409, %v413
    %v416 = vsub.f32 %v322, %v414
    %v417 = vsub.f32 %v323, %v415
    %v418 = vadd.f32 %v416, %v417
    %v419 = vsub.f32 %v105, %v418
    %v420 = vadd.f32 %v419, %v135
    %v421 = vmul.f32 %v420, %v34
    %v422 = vadd.f32 %v421, 0.0
    %423 = vst [vmem:[#allocation5] sm:$0xff] %v422
    // Predicated region
    $region10: #{tpu_custom_call.1} parent=1 // pred_check
      _
    $region11: #{tpu_custom_call.1} parent=1 // pred_check_branch
      %425 = sbr.rel (0) target = $region13
    $region12: #{tpu_custom_call.1} parent=1 // pred_region
      %s427 = ssub.s32 128, 128
      %428 = vsyncadd [#allocation4], %s427
      %s430 = sshll.u32 [#allocation5], 4
      %s431 = int_to_ptr.vmem [resolvable:$true] %s430
      %433 = dma.vmem_to_hbm [thread:$0]  %s431, 128, %s1, [#allocation4]
    $region13: #{tpu_custom_call.1} parent=1 // pred_fallthru
      _
    // Predicated region
    $region14: #{tpu_custom_call.1} parent=1 // pred_check
      _
    $region15: #{tpu_custom_call.1} parent=1 // pred_check_branch
      %435 = sbr.rel (0) target = $region17
    $region16: #{tpu_custom_call.1} parent=1 // pred_region
      %436 = dma.done [#allocation4], 128
    $region17: #{tpu_custom_call.1} parent=1 // pred_fallthru
      _
    %437 = vsyncpa [#allocation3], 1
    %438 = vsyncpa [#allocation4], 1

</llo_original>
